<compile_context>
chip_gen: v7x
topology: tpu7x:2x2x1
jax: 0.10.0
libtpu: 0.0.40
codegen_flags: <defaults>
</compile_context>

<pallas_src>
import functools

import jax
import jax.numpy as jnp
from jax.experimental import pallas as pl
from jax.experimental.pallas import tpu as pltpu

NEG_SLOPE = 0.01


def _round_up(v, m):
    return -(-v // m) * m


def _pick_grid_steps(n):
    """One big step per TensorCore: 1 on v5e/v6e (single TC), 2 on v7x (two TCs)."""
    try:
        kind = jax.devices()[0].device_kind.lower()
    except Exception:
        kind = ""
    two_core = ("v7" in kind) or ("7x" in kind)
    g = 2 if (two_core and n >= 2 and n % 2 == 0) else 1
    # Keep the per-step static unroll / patch size bounded for very large batches.
    while n % g != 0 or (n // g) > 32:
        g += 1
    return g


def _convt_kernel(x_ref, w_ref, b_ref, o_ref, *, Nb, FRAME, NbF, taps, pad_rows):
    # x_ref : (1, Cin, NbF + TAIL)  zero-pad framed activations, images on lane axis
    # w_ref : (Cout, KKC_pad)       folded correlation weights (tap-major, ci minor)
    # b_ref : (Cout, 1)             bias
    # o_ref : (Nb, Cout, FRAME)     wide-frame output, FRAME is a multiple of 128
    a = x_ref[0].astype(jnp.float32)                    # (Cin, NbF + TAIL)
    a = jnp.where(a >= 0, a, NEG_SLOPE * a)             # LeakyReLU (zero pad stays 0)

    # Each transposed-conv tap is a static lane shift of the framed activation.
    rows = [a[:, t:t + NbF] for t in taps]              # K*K slices of (Cin, NbF)
    if pad_rows:                                        # hoisted: created once per step
        rows.append(jnp.zeros((pad_rows, NbF), jnp.float32))
    patch = jnp.concatenate(rows, axis=0)               # (KKC_pad, NbF)

    # Single MXU matmul for all images in this grid step.
    acc = jnp.dot(w_ref[...], patch, preferred_element_type=jnp.float32)  # (Cout, NbF)
    acc = acc + b_ref[...]
    out = acc.astype(o_ref.dtype)

    for j in range(Nb):                                 # lane-dense, vreg-aligned stores
        o_ref[j] = out[:, j * FRAME:(j + 1) * FRAME]


def conv_t_forward(x_nchw, weight, bias, *, grid_steps=None):
    """LeakyReLU(0.01) followed by ConvTranspose2d(stride=1, padding=0).

    x_nchw : (N, Cin, H, W)            float32
    weight : (Cin, Cout, K, K)         PyTorch ConvTranspose2d weight layout
    bias   : (Cout,)
    returns: (N, Cout, H+K-1, W+K-1)   NCHW, matching PyTorch
    """
    N, Cin, H, W = x_nchw.shape
    wCin, Cout, K, K2 = weight.shape
    assert wCin == Cin and K == K2

    PAD = K - 1
    Hout, Wout = H + PAD, W + PAD
    Hp, Wp = H + 2 * PAD, W + 2 * PAD
    L = Hout * Wp                               # valid wide-frame length per image
    max_shift = PAD * Wp + PAD                  # largest tap lane-shift
    FRAME = _round_up(Hp * Wp + PAD, 128)       # per-image lane frame (vreg aligned)
    TAIL = _round_up(max_shift, 128)            # zero tail so last frame's shifts stay in-bounds

    G = grid_steps or _pick_grid_steps(N)
    assert N % G == 0
    Nb = N // G
    NbF = Nb * FRAME

    taps = tuple(kh * Wp + kw for kh in range(K) for kw in range(K))
    KKC = K * K * Cin
    KKC_pad = _round_up(KKC, 8)
    pad_rows = KKC_pad - KKC

    # ConvTranspose2d(stride=1, pad=0) == full correlation with the flipped kernel;
    # fold (kh, kw, ci) into one contraction axis ordered tap-major.
    wf = weight[:, :, ::-1, ::-1]                                   # (Cin, Cout, K, K)
    w_mat = jnp.transpose(wf, (1, 2, 3, 0)).reshape(Cout, KKC)      # (Cout, K*K*Cin)
    if pad_rows:
        w_mat = jnp.pad(w_mat, ((0, 0), (0, pad_rows)))
    w_mat = w_mat.astype(jnp.float32)
    b2d = bias.reshape(Cout, 1).astype(jnp.float32)

    # Layout plumbing in the wrapper (tiny arrays, fuses into one XLA pad/copy):
    # zero-pad each image to (Hp, Wp), flatten, pad to FRAME lanes, and lay the
    # images contiguously on the lane axis with Cin on the sublane axis.
    xp = jnp.pad(x_nchw, ((0, 0), (0, 0), (PAD, PAD), (PAD, PAD)))  # (N, Cin, Hp, Wp)
    xp = xp.reshape(N, Cin, Hp * Wp)
    xp = jnp.pad(xp, ((0, 0), (0, 0), (0, FRAME - Hp * Wp)))        # (N, Cin, FRAME)
    xf = jnp.transpose(xp, (1, 0, 2)).reshape(Cin, N * FRAME)       # (Cin, N*FRAME)
    xf = jnp.pad(xf, ((0, 0), (0, TAIL)))                           # zero tail
    xblocks = jnp.stack(
        [xf[:, g * NbF: g * NbF + NbF + TAIL] for g in range(G)], axis=0
    )                                                               # (G, Cin, NbF+TAIL)

    kernel = functools.partial(_convt_kernel, Nb=Nb, FRAME=FRAME, NbF=NbF,
                               taps=taps, pad_rows=pad_rows)

    out_wide = pl.pallas_call(
        kernel,
        out_shape=jax.ShapeDtypeStruct((N, Cout, FRAME), x_nchw.dtype),
        grid_spec=pltpu.PrefetchScalarGridSpec(
            num_scalar_prefetch=0,
            grid=(G,),
            in_specs=[
                pl.BlockSpec((1, Cin, NbF + TAIL), lambda i: (i, 0, 0)),
                pl.BlockSpec((Cout, KKC_pad), lambda i: (0, 0)),
                pl.BlockSpec((Cout, 1), lambda i: (0, 0)),
            ],
            out_specs=pl.BlockSpec((Nb, Cout, FRAME), lambda i: (i, 0, 0)),
        ),
        compiler_params=pltpu.CompilerParams(
            dimension_semantics=("parallel",)),
    )(xblocks, w_mat, b2d)

    # Drop throwaway wide-frame columns; result is already NCHW.
    return out_wide[:, :, :L].reshape(N, Cout, Hout, Wp)[:, :, :, :Wout]


def _reference(x_nchw, weight, bias):
    """Same math via XLA (independent sanity check of the Pallas kernel)."""
    K = weight.shape[2]
    a = jnp.where(x_nchw >= 0, x_nchw, NEG_SLOPE * x_nchw)
    w_corr = jnp.transpose(weight[:, :, ::-1, ::-1], (2, 3, 0, 1))   # HWIO
    out = jax.lax.conv_general_dilated(
        a, w_corr, window_strides=(1, 1),
        padding=((K - 1, K - 1), (K - 1, K - 1)),
        dimension_numbers=("NCHW", "HWIO", "NCHW"))
    return out + bias[None, :, None, None]


if __name__ == "__main__":
    key = jax.random.PRNGKey(0)
    kx, kw, kb = jax.random.split(key, 3)

    N, Cin, Cout, H, W, K = 2, 4, 8, 16, 16, 3
    x = jax.random.normal(kx, (N, Cin, H, W), dtype=jnp.float32)
    # Deterministic synthetic params (shapes match nn.ConvTranspose2d(Cin, Cout, 3)).
    fan = Cin * K * K
    bound = 1.0 / (fan ** 0.5)
    weight = jax.random.uniform(kw, (Cin, Cout, K, K), jnp.float32, -bound, bound)
    bias = jax.random.uniform(kb, (Cout,), jnp.float32, -bound, bound)

    convt = jax.jit(conv_t_forward)
    out = jax.block_until_ready(convt(x, weight, bias))

    ref = _reference(x, weight, bias)
    assert out.shape == (N, Cout, H + K - 1, W + K - 1), out.shape
    err = float(jnp.max(jnp.abs(out - ref)))
    assert jnp.allclose(out, ref, atol=1e-4, rtol=1e-4), err
    print("KERNEL_OK")
</pallas_src>

<mosaic_0001>
module attributes {stable_mosaic.version = 11 : i64} {
  func.func @_convt_kernel(%arg0: i32, %arg1: memref<1x4x1152xf32, #tpu.memory_space<vmem>>, %arg2: memref<8x40xf32, #tpu.memory_space<vmem>>, %arg3: memref<8x1xf32, #tpu.memory_space<vmem>>, %arg4: memref<2x8x512xf32, #tpu.memory_space<vmem>>) attributes {dimension_semantics = [#tpu.dimension_semantics<parallel>], iteration_bounds = array<i64: 1>, scalar_prefetch = 0 : i64, scratch_operands = 0 : i64, tpu.core_type = #tpu.core_type<tc>, window_params = [{transform_indices = @transform_0, window_bounds = array<i64: 1, 4, 1152>}, {pipeline_mode = #tpu.pipeline_mode<synchronous>, transform_indices = @transform_1, window_bounds = array<i64: 8, 40>}, {pipeline_mode = #tpu.pipeline_mode<synchronous>, transform_indices = @transform_2, window_bounds = array<i64: 8, 1>}, {transform_indices = @transform_3, window_bounds = array<i64: 2, 8, 512>}]} {
    %c0 = arith.constant 0 : index
    %c0_0 = arith.constant 0 : index
    %c0_1 = arith.constant 0 : index
    %0 = vector.load %arg1[%c0, %c0_0, %c0_1] : memref<1x4x1152xf32, #tpu.memory_space<vmem>>, vector<1x4x1152xf32>
    %1 = vector.shape_cast %0 : vector<1x4x1152xf32> to vector<4x1152xf32>
    %cst = arith.constant 0.000000e+00 : f32
    %2 = vector.broadcast %cst : f32 to vector<4x1152xf32>
    %3 = arith.cmpf oge, %1, %2 : vector<4x1152xf32>
    %cst_2 = arith.constant 0.00999999977 : f32
    %4 = vector.broadcast %cst_2 : f32 to vector<4x1152xf32>
    %5 = arith.mulf %4, %1 : vector<4x1152xf32>
    %6 = arith.select %3, %1, %5 : vector<4x1152xi1>, vector<4x1152xf32>
    %7 = vector.extract_strided_slice %6 {offsets = [0, 0], sizes = [4, 1024], strides = [1, 1]} : vector<4x1152xf32> to vector<4x1024xf32>
    %8 = vector.extract_strided_slice %6 {offsets = [0, 1], sizes = [4, 1024], strides = [1, 1]} : vector<4x1152xf32> to vector<4x1024xf32>
    %9 = vector.extract_strided_slice %6 {offsets = [0, 2], sizes = [4, 1024], strides = [1, 1]} : vector<4x1152xf32> to vector<4x1024xf32>
    %10 = vector.extract_strided_slice %6 {offsets = [0, 20], sizes = [4, 1024], strides = [1, 1]} : vector<4x1152xf32> to vector<4x1024xf32>
    %11 = vector.extract_strided_slice %6 {offsets = [0, 21], sizes = [4, 1024], strides = [1, 1]} : vector<4x1152xf32> to vector<4x1024xf32>
    %12 = vector.extract_strided_slice %6 {offsets = [0, 22], sizes = [4, 1024], strides = [1, 1]} : vector<4x1152xf32> to vector<4x1024xf32>
    %13 = vector.extract_strided_slice %6 {offsets = [0, 40], sizes = [4, 1024], strides = [1, 1]} : vector<4x1152xf32> to vector<4x1024xf32>
    %14 = vector.extract_strided_slice %6 {offsets = [0, 41], sizes = [4, 1024], strides = [1, 1]} : vector<4x1152xf32> to vector<4x1024xf32>
    %15 = vector.extract_strided_slice %6 {offsets = [0, 42], sizes = [4, 1024], strides = [1, 1]} : vector<4x1152xf32> to vector<4x1024xf32>
    %cst_3 = arith.constant 0.000000e+00 : f32
    %16 = vector.broadcast %cst_3 : f32 to vector<4x1024xf32>
    %17 = tpu.concatenate %7, %8, %9, %10, %11, %12, %13, %14, %15, %16 in 0 : vector<4x1024xf32>, vector<4x1024xf32>, vector<4x1024xf32>, vector<4x1024xf32>, vector<4x1024xf32>, vector<4x1024xf32>, vector<4x1024xf32>, vector<4x1024xf32>, vector<4x1024xf32>, vector<4x1024xf32> -> vector<40x1024xf32>
    %c0_4 = arith.constant 0 : index
    %c0_5 = arith.constant 0 : index
    %18 = vector.load %arg2[%c0_4, %c0_5] : memref<8x40xf32, #tpu.memory_space<vmem>>, vector<8x40xf32>
    %cst_6 = arith.constant dense<0.000000e+00> : vector<8x1024xf32>
    %19 = tpu.matmul %18, %17, %cst_6 {dimension_numbers = #tpu.dot_dimension_numbers<[1], [0], [0], [1], [0, 0, 1, 1], [], []>} : vector<8x40xf32>, vector<40x1024xf32>, vector<8x1024xf32> -> vector<8x1024xf32>
    %c0_7 = arith.constant 0 : index
    %c0_8 = arith.constant 0 : index
    %20 = vector.load %arg3[%c0_7, %c0_8] : memref<8x1xf32, #tpu.memory_space<vmem>>, vector<8x1xf32>
    %21 = vector.broadcast %20 : vector<8x1xf32> to vector<8x1024xf32>
    %22 = arith.addf %19, %21 : vector<8x1024xf32>
    %23 = vector.extract_strided_slice %22 {offsets = [0, 0], sizes = [8, 512], strides = [1, 1]} : vector<8x1024xf32> to vector<8x512xf32>
    %c0_9 = arith.constant 0 : index
    %c0_10 = arith.constant 0 : index
    %c0_11 = arith.constant 0 : index
    %24 = vector.load %arg4[%c0_9, %c0_10, %c0_11] : memref<2x8x512xf32, #tpu.memory_space<vmem>>, vector<1x8x512xf32>
    %25 = vector.shape_cast %24 : vector<1x8x512xf32> to vector<8x512xf32>
    %26 = vector.shape_cast %23 : vector<8x512xf32> to vector<1x8x512xf32>
    tpu.vector_store %arg4[%c0_9, %c0_10, %c0_11], %26 {strides = array<i32>} : memref<2x8x512xf32, #tpu.memory_space<vmem>>, vector<1x8x512xf32>,
    %27 = vector.extract_strided_slice %22 {offsets = [0, 512], sizes = [8, 512], strides = [1, 1]} : vector<8x1024xf32> to vector<8x512xf32>
    %c1 = arith.constant 1 : index
    %c0_12 = arith.constant 0 : index
    %c0_13 = arith.constant 0 : index
    %28 = vector.load %arg4[%c1, %c0_12, %c0_13] : memref<2x8x512xf32, #tpu.memory_space<vmem>>, vector<1x8x512xf32>
    %29 = vector.shape_cast %28 : vector<1x8x512xf32> to vector<8x512xf32>
    %30 = vector.shape_cast %27 : vector<8x512xf32> to vector<1x8x512xf32>
    tpu.vector_store %arg4[%c1, %c0_12, %c0_13], %30 {strides = array<i32>} : memref<2x8x512xf32, #tpu.memory_space<vmem>>, vector<1x8x512xf32>,
    return
  }
  func.func @transform_0(%arg0: i32) -> (i32, i32, i32) {
    %c0_i32 = arith.constant 0 : i32
    %c0_i32_0 = arith.constant 0 : i32
    %c0_i32_1 = arith.constant 0 : i32
    return %arg0, %c0_i32, %c0_i32_0 : i32, i32, i32
  }
  func.func @transform_1(%arg0: i32) -> (i32, i32) {
    %c0_i32 = arith.constant 0 : i32
    %c0_i32_0 = arith.constant 0 : i32
    %c0_i32_1 = arith.constant 0 : i32
    return %c0_i32, %c0_i32_0 : i32, i32
  }
  func.func @transform_2(%arg0: i32) -> (i32, i32) {
    %c0_i32 = arith.constant 0 : i32
    %c0_i32_0 = arith.constant 0 : i32
    %c0_i32_1 = arith.constant 0 : i32
    return %c0_i32, %c0_i32_0 : i32, i32
  }
  func.func @transform_3(%arg0: i32) -> (i32, i32, i32) {
    %c0_i32 = arith.constant 0 : i32
    %c0_i32_0 = arith.constant 0 : i32
    %c0_i32_1 = arith.constant 0 : i32
    return %arg0, %c0_i32, %c0_i32_0 : i32, i32, i32
  }
}

</mosaic_0001>

<llo_original>
// kernel: conv_t_forward.1
$region0: #{conv_t_forward.1}
  #allocation0 [shape = 'u32[]', space=smem, size = 0x4, offset = 0x4, fixed_abs, tag = 'smem constant byte address 0x4 - core index']
  #allocation1 [shape = 'u32[144,128]{1,0:T(1,128)}', space=vmem, size = 0x12000, scoped, tag = 'internal scratch']
  %s0 = inlined_call_operand.vmem [shape: f32[1,4,1152], index: 0, kind: input, shape index: {}]
  %s1 = inlined_call_operand.vmem [shape: f32[8,40], index: 1, kind: input, shape index: {}]
  %s2 = inlined_call_operand.vmem [shape: f32[8,1], index: 2, kind: input, shape index: {}]
  %s3 = inlined_call_operand.vmem [shape: f32[2,8,512], index: 3, kind: output, shape index: {}]
  %s4 = sld [smem:[#allocation0]]
  $region22: #{conv_t_forward.1} parent=0
    _
  %s6 = ssub.s32 1, %s4
  %s7 = scalar_select 0, %s6, %s4
  // Predicated region
  $region2: #{conv_t_forward.1} parent=0 // pred_check
    _
  $region3: #{conv_t_forward.1} parent=0 // pred_check_branch
    %9 = sbr.rel (0) target = $region5
  $region4: #{conv_t_forward.1} parent=0 // pred_region
    _
  $region5: #{conv_t_forward.1} parent=0 // pred_fallthru
    _
  // Predicated region
  $region6: #{conv_t_forward.1} parent=0 // pred_check
    _
  $region7: #{conv_t_forward.1} parent=0 // pred_check_branch
    %11 = sbr.rel (0) target = $region9
  $region8: #{conv_t_forward.1} parent=0 // pred_region
    _
  $region9: #{conv_t_forward.1} parent=0 // pred_fallthru
    _
  // Predicated region
  $region10: #{conv_t_forward.1} parent=0 // pred_check
    _
  $region11: #{conv_t_forward.1} parent=0 // pred_check_branch
    %13 = sbr.rel (0) target = $region13
  $region12: #{conv_t_forward.1} parent=0 // pred_region
    _
  $region13: #{conv_t_forward.1} parent=0 // pred_fallthru
    _
  %v14 = vld [vmem:[%s0] sm:$0xff]
  %v15 = vld [vmem:[%s0 + $0x8] sm:$0xff]
  %v16 = vld [vmem:[%s0 + $0x10] sm:$0xff]
  %v17 = vld [vmem:[%s0 + $0x18] sm:$0xff]
  %v18 = vld [vmem:[%s0 + $0x20] sm:$0xf]
  %vm19 = vcmp.ge.f32.partialorder %v14, 0.0
  %vm20 = vcmp.ge.f32.partialorder %v15, 0.0
  %vm21 = vcmp.ge.f32.partialorder %v16, 0.0
  %vm22 = vcmp.ge.f32.partialorder %v17, 0.0
  %vm23 = vcmp.ge.f32.partialorder %v18, 0.0
  %v24 = vmul.f32 %v14, 0.01
  %v25 = vmul.f32 %v15, 0.01
  %v26 = vmul.f32 %v16, 0.01
  %v27 = vmul.f32 %v17, 0.01
  %v28 = vmul.f32 %v18, 0.01
  %v29 = vsel %vm19, %v14, %v24
  %v30 = vsel %vm20, %v15, %v25
  %v31 = vsel %vm21, %v16, %v26
  %v32 = vsel %vm22, %v17, %v27
  %v33 = vsel %vm23, %v18, %v28
  %v38 = vcombine.high %v29, %v29
  %v39 = vcombine.high %v30, %v30
  %v40 = vcombine.high %v31, %v31
  %v41 = vcombine.high %v32, %v32
  %v47 = vcombine.low %v29, %v29
  %v48 = vcombine.low %v30, %v30
  %v49 = vcombine.low %v31, %v31
  %v50 = vcombine.low %v32, %v32
  %v51 = vcombine.low %v33, %v33
  %52 = vrot.lane.b32.xlu0 %v47, 127
  %v53 = vpop.permute.xlu0 %52
  %54 = vrot.lane.b32.xlu0 %v29, 127
  %v55 = vpop.permute.xlu0 %54
  %56 = vrot.lane.b32.xlu0 %v48, 127
  %v57 = vpop.permute.xlu0 %56
  %58 = vrot.lane.b32.xlu0 %v30, 127
  %v59 = vpop.permute.xlu0 %58
  %60 = vrot.lane.b32.xlu0 %v49, 127
  %v61 = vpop.permute.xlu0 %60
  %62 = vrot.lane.b32.xlu0 %v31, 127
  %v63 = vpop.permute.xlu0 %62
  %64 = vrot.lane.b32.xlu0 %v50, 127
  %v65 = vpop.permute.xlu0 %64
  %66 = vrot.lane.b32.xlu0 %v32, 127
  %v67 = vpop.permute.xlu0 %66
  %68 = vrot.lane.b32.xlu0 %v51, 127
  %v69 = vpop.permute.xlu0 %68
  %vm70 = vcmask 1039360
  %v71 = vsel %vm70, %v53, %v55
  %v72 = vsel %vm70, %v55, %v57
  %v73 = vsel %vm70, %v57, %v59
  %v74 = vsel %vm70, %v59, %v61
  %v75 = vsel %vm70, %v61, %v63
  %v76 = vsel %vm70, %v63, %v65
  %v77 = vsel %vm70, %v65, %v67
  %v78 = vsel %vm70, %v67, %v69
  %87 = vrot.lane.b32.xlu0 %v29, 126
  %v88 = vpop.permute.xlu0 %87
  %89 = vrot.lane.b32.xlu0 %v38, 126
  %v90 = vpop.permute.xlu0 %89
  %91 = vrot.lane.b32.xlu0 %v30, 126
  %v92 = vpop.permute.xlu0 %91
  %93 = vrot.lane.b32.xlu0 %v39, 126
  %v94 = vpop.permute.xlu0 %93
  %95 = vrot.lane.b32.xlu0 %v31, 126
  %v96 = vpop.permute.xlu0 %95
  %97 = vrot.lane.b32.xlu0 %v40, 126
  %v98 = vpop.permute.xlu0 %97
  %99 = vrot.lane.b32.xlu0 %v32, 126
  %v100 = vpop.permute.xlu0 %99
  %101 = vrot.lane.b32.xlu0 %v41, 126
  %v102 = vpop.permute.xlu0 %101
  %103 = vrot.lane.b32.xlu0 %v33, 126
  %v104 = vpop.permute.xlu0 %103
  %vm105 = vcmask 1031168
  %v106 = vsel %vm105, %v88, %v90
  %v107 = vsel %vm105, %v90, %v92
  %v108 = vsel %vm105, %v92, %v94
  %v109 = vsel %vm105, %v94, %v96
  %v110 = vsel %vm105, %v96, %v98
  %v111 = vsel %vm105, %v98, %v100
  %v112 = vsel %vm105, %v100, %v102
  %v113 = vsel %vm105, %v102, %v104
  %122 = vrot.lane.b32.xlu0 %v47, 108
  %v123 = vpop.permute.xlu0 %122
  %124 = vrot.lane.b32.xlu0 %v29, 108
  %v125 = vpop.permute.xlu0 %124
  %126 = vrot.lane.b32.xlu0 %v48, 108
  %v127 = vpop.permute.xlu0 %126
  %128 = vrot.lane.b32.xlu0 %v30, 108
  %v129 = vpop.permute.xlu0 %128
  %130 = vrot.lane.b32.xlu0 %v49, 108
  %v131 = vpop.permute.xlu0 %130
  %132 = vrot.lane.b32.xlu0 %v31, 108
  %v133 = vpop.permute.xlu0 %132
  %134 = vrot.lane.b32.xlu0 %v50, 108
  %v135 = vpop.permute.xlu0 %134
  %136 = vrot.lane.b32.xlu0 %v32, 108
  %v137 = vpop.permute.xlu0 %136
  %138 = vrot.lane.b32.xlu0 %v51, 108
  %v139 = vpop.permute.xlu0 %138
  %vm140 = vcmask 883712
  %v141 = vsel %vm140, %v123, %v125
  %v142 = vsel %vm140, %v125, %v127
  %v143 = vsel %vm140, %v127, %v129
  %v144 = vsel %vm140, %v129, %v131
  %v145 = vsel %vm140, %v131, %v133
  %v146 = vsel %vm140, %v133, %v135
  %v147 = vsel %vm140, %v135, %v137
  %v148 = vsel %vm140, %v137, %v139
  %157 = vrot.lane.b32.xlu0 %v29, 107
  %v158 = vpop.permute.xlu0 %157
  %159 = vrot.lane.b32.xlu0 %v38, 107
  %v160 = vpop.permute.xlu0 %159
  %161 = vrot.lane.b32.xlu0 %v30, 107
  %v162 = vpop.permute.xlu0 %161
  %163 = vrot.lane.b32.xlu0 %v39, 107
  %v164 = vpop.permute.xlu0 %163
  %165 = vrot.lane.b32.xlu0 %v31, 107
  %v166 = vpop.permute.xlu0 %165
  %167 = vrot.lane.b32.xlu0 %v40, 107
  %v168 = vpop.permute.xlu0 %167
  %169 = vrot.lane.b32.xlu0 %v32, 107
  %v170 = vpop.permute.xlu0 %169
  %171 = vrot.lane.b32.xlu0 %v41, 107
  %v172 = vpop.permute.xlu0 %171
  %173 = vrot.lane.b32.xlu0 %v33, 107
  %v174 = vpop.permute.xlu0 %173
  %vm175 = vcmask 875520
  %v176 = vsel %vm175, %v158, %v160
  %v177 = vsel %vm175, %v160, %v162
  %v178 = vsel %vm175, %v162, %v164
  %v179 = vsel %vm175, %v164, %v166
  %v180 = vsel %vm175, %v166, %v168
  %v181 = vsel %vm175, %v168, %v170
  %v182 = vsel %vm175, %v170, %v172
  %v183 = vsel %vm175, %v172, %v174
  %192 = vrot.lane.b32.xlu0 %v47, 106
  %v193 = vpop.permute.xlu0 %192
  %194 = vrot.lane.b32.xlu0 %v29, 106
  %v195 = vpop.permute.xlu0 %194
  %196 = vrot.lane.b32.xlu0 %v48, 106
  %v197 = vpop.permute.xlu0 %196
  %198 = vrot.lane.b32.xlu0 %v30, 106
  %v199 = vpop.permute.xlu0 %198
  %200 = vrot.lane.b32.xlu0 %v49, 106
  %v201 = vpop.permute.xlu0 %200
  %202 = vrot.lane.b32.xlu0 %v31, 106
  %v203 = vpop.permute.xlu0 %202
  %204 = vrot.lane.b32.xlu0 %v50, 106
  %v205 = vpop.permute.xlu0 %204
  %206 = vrot.lane.b32.xlu0 %v32, 106
  %v207 = vpop.permute.xlu0 %206
  %208 = vrot.lane.b32.xlu0 %v51, 106
  %v209 = vpop.permute.xlu0 %208
  %vm210 = vcmask 867328
  %v211 = vsel %vm210, %v193, %v195
  %v212 = vsel %vm210, %v195, %v197
  %v213 = vsel %vm210, %v197, %v199
  %v214 = vsel %vm210, %v199, %v201
  %v215 = vsel %vm210, %v201, %v203
  %v216 = vsel %vm210, %v203, %v205
  %v217 = vsel %vm210, %v205, %v207
  %v218 = vsel %vm210, %v207, %v209
  %227 = vrot.lane.b32.xlu0 %v29, 88
  %v228 = vpop.permute.xlu0 %227
  %229 = vrot.lane.b32.xlu0 %v38, 88
  %v230 = vpop.permute.xlu0 %229
  %231 = vrot.lane.b32.xlu0 %v30, 88
  %v232 = vpop.permute.xlu0 %231
  %233 = vrot.lane.b32.xlu0 %v39, 88
  %v234 = vpop.permute.xlu0 %233
  %235 = vrot.lane.b32.xlu0 %v31, 88
  %v236 = vpop.permute.xlu0 %235
  %237 = vrot.lane.b32.xlu0 %v40, 88
  %v238 = vpop.permute.xlu0 %237
  %239 = vrot.lane.b32.xlu0 %v32, 88
  %v240 = vpop.permute.xlu0 %239
  %241 = vrot.lane.b32.xlu0 %v41, 88
  %v242 = vpop.permute.xlu0 %241
  %243 = vrot.lane.b32.xlu0 %v33, 88
  %v244 = vpop.permute.xlu0 %243
  %vm245 = vcmask 719872
  %v246 = vsel %vm245, %v228, %v230
  %v247 = vsel %vm245, %v230, %v232
  %v248 = vsel %vm245, %v232, %v234
  %v249 = vsel %vm245, %v234, %v236
  %v250 = vsel %vm245, %v236, %v238
  %v251 = vsel %vm245, %v238, %v240
  %v252 = vsel %vm245, %v240, %v242
  %v253 = vsel %vm245, %v242, %v244
  %262 = vrot.lane.b32.xlu0 %v47, 87
  %v263 = vpop.permute.xlu0 %262
  %264 = vrot.lane.b32.xlu0 %v29, 87
  %v265 = vpop.permute.xlu0 %264
  %266 = vrot.lane.b32.xlu0 %v48, 87
  %v267 = vpop.permute.xlu0 %266
  %268 = vrot.lane.b32.xlu0 %v30, 87
  %v269 = vpop.permute.xlu0 %268
  %270 = vrot.lane.b32.xlu0 %v49, 87
  %v271 = vpop.permute.xlu0 %270
  %272 = vrot.lane.b32.xlu0 %v31, 87
  %v273 = vpop.permute.xlu0 %272
  %274 = vrot.lane.b32.xlu0 %v50, 87
  %v275 = vpop.permute.xlu0 %274
  %276 = vrot.lane.b32.xlu0 %v32, 87
  %v277 = vpop.permute.xlu0 %276
  %278 = vrot.lane.b32.xlu0 %v51, 87
  %v279 = vpop.permute.xlu0 %278
  %vm280 = vcmask 711680
  %v281 = vsel %vm280, %v263, %v265
  %v282 = vsel %vm280, %v265, %v267
  %v283 = vsel %vm280, %v267, %v269
  %v284 = vsel %vm280, %v269, %v271
  %v285 = vsel %vm280, %v271, %v273
  %v286 = vsel %vm280, %v273, %v275
  %v287 = vsel %vm280, %v275, %v277
  %v288 = vsel %vm280, %v277, %v279
  %297 = vrot.lane.b32.xlu0 %v29, 86
  %v298 = vpop.permute.xlu0 %297
  %299 = vrot.lane.b32.xlu0 %v38, 86
  %v300 = vpop.permute.xlu0 %299
  %301 = vrot.lane.b32.xlu0 %v30, 86
  %v302 = vpop.permute.xlu0 %301
  %303 = vrot.lane.b32.xlu0 %v39, 86
  %v304 = vpop.permute.xlu0 %303
  %305 = vrot.lane.b32.xlu0 %v31, 86
  %v306 = vpop.permute.xlu0 %305
  %307 = vrot.lane.b32.xlu0 %v40, 86
  %v308 = vpop.permute.xlu0 %307
  %309 = vrot.lane.b32.xlu0 %v32, 86
  %v310 = vpop.permute.xlu0 %309
  %311 = vrot.lane.b32.xlu0 %v41, 86
  %v312 = vpop.permute.xlu0 %311
  %313 = vrot.lane.b32.xlu0 %v33, 86
  %v314 = vpop.permute.xlu0 %313
  %vm315 = vcmask 703488
  %v316 = vsel %vm315, %v298, %v300
  %v317 = vsel %vm315, %v300, %v302
  %v318 = vsel %vm315, %v302, %v304
  %v319 = vsel %vm315, %v304, %v306
  %v320 = vsel %vm315, %v306, %v308
  %v321 = vsel %vm315, %v308, %v310
  %v322 = vsel %vm315, %v310, %v312
  %v323 = vsel %vm315, %v312, %v314
  %vm332 = vcmask 1043456
  %v333 = vsel %vm332, %v29, %v71
  %v334 = vsel %vm332, %v38, %v72
  %v335 = vsel %vm332, %v30, %v73
  %v336 = vsel %vm332, %v39, %v74
  %v337 = vsel %vm332, %v31, %v75
  %v338 = vsel %vm332, %v40, %v76
  %v339 = vsel %vm332, %v32, %v77
  %v340 = vsel %vm332, %v41, %v78
  %v341 = vsel %vm332, %v106, %v141
  %v342 = vsel %vm332, %v107, %v142
  %v343 = vsel %vm332, %v108, %v143
  %v344 = vsel %vm332, %v109, %v144
  %v345 = vsel %vm332, %v110, %v145
  %v346 = vsel %vm332, %v111, %v146
  %v347 = vsel %vm332, %v112, %v147
  %v348 = vsel %vm332, %v113, %v148
  %v349 = vsel %vm332, %v176, %v211
  %v350 = vsel %vm332, %v177, %v212
  %v351 = vsel %vm332, %v178, %v213
  %v352 = vsel %vm332, %v179, %v214
  %v353 = vsel %vm332, %v180, %v215
  %v354 = vsel %vm332, %v181, %v216
  %v355 = vsel %vm332, %v182, %v217
  %v356 = vsel %vm332, %v183, %v218
  %v357 = vsel %vm332, %v246, %v281
  %v358 = vsel %vm332, %v247, %v282
  %v359 = vsel %vm332, %v248, %v283
  %v360 = vsel %vm332, %v249, %v284
  %v361 = vsel %vm332, %v250, %v285
  %v362 = vsel %vm332, %v251, %v286
  %v363 = vsel %vm332, %v252, %v287
  %v364 = vsel %vm332, %v253, %v288
  %v365 = vsel %vm332, %v316, 0.0
  %v366 = vsel %vm332, %v317, 0.0
  %v367 = vsel %vm332, %v318, 0.0
  %v368 = vsel %vm332, %v319, 0.0
  %v369 = vsel %vm332, %v320, 0.0
  %v370 = vsel %vm332, %v321, 0.0
  %v371 = vsel %vm332, %v322, 0.0
  %v372 = vsel %vm332, %v323, 0.0
  %v373 = vld [vmem:[%s1] sm:$0xff]
  %v374 = vld [vmem:[%s2] sm:$0xff]
  %376 = vset.pattern.permute.xlu0 0
  %377 = vperm.xlu0 %376, %v374
  %v378 = vpop.permute.xlu0 %377
  %vm380 = vcmask 326656
  %v382 = vsel %vm380, %v373, 0
  %384 = vmatprep.subr.mxu0 %v334
  %385 = vmatpush1.msra.mxu0 %v333
  %386 = vmatprep.subr.mxu0 %v342
  %387 = vmatpush1.msra.mxu0 %v341
  %388 = vmatprep.subr.mxu0 %v350
  %389 = vmatpush1.msra.mxu0 %v349
  %390 = vmatprep.subr.mxu0 %v358
  %391 = vmatpush1.msra.mxu0 %v357
  %392 = vmatprep.subr.mxu0 %v366
  %393 = vmatpush1.msra.mxu0 %v365
  %394 = vmatprep.subr.mxu0 0.0
  %395 = vmatpush1.msra.mxu0 0.0
  %396 = vmatprep.subr.mxu0 0.0
  %397 = vmatpush1.msra.mxu0 0.0
  %398 = vmatprep.subr.mxu0 0.0
  %399 = vmatpush1.msra.mxu0 0.0
  %400 = vmatprep.subr.mxu0 0.0
  %401 = vmatpush1.msra.mxu0 0.0
  %402 = vmatprep.subr.mxu0 0.0
  %403 = vmatpush1.msra.mxu0 0.0
  %404 = vmatprep.subr.mxu0 0.0
  %405 = vmatpush1.msra.mxu0 0.0
  %406 = vmatprep.subr.mxu0 0.0
  %407 = vmatpush1.msra.mxu0 0.0
  %408 = vmatprep.subr.mxu0 0.0
  %409 = vmatpush1.msra.mxu0 0.0
  %410 = vmatprep.subr.mxu0 0.0
  %411 = vmatpush1.msra.mxu0 0.0
  %412 = vmatprep.subr.mxu0 0.0
  %413 = vmatpush1.msra.mxu0 0.0
  %414 = vmatprep.subr.mxu0 0.0
  %415 = vmatpush1.msra.mxu0 0.0
  %416 = vmatprep.subr.mxu0 0.0
  %417 = vmatpush1.msra.mxu0 0.0
  %418 = vmatprep.subr.mxu0 0.0
  %419 = vmatpush1.msra.mxu0 0.0
  %420 = vmatprep.subr.mxu0 0.0
  %421 = vmatpush1.msra.mxu0 0.0
  %422 = vmatprep.subr.mxu0 0.0
  %423 = vmatpush1.msra.mxu0 0.0
  %424 = vmatprep.subr.mxu0 0.0
  %425 = vmatpush1.msra.mxu0 0.0
  %426 = vmatprep.subr.mxu0 0.0
  %427 = vmatpush1.msra.mxu0 0.0
  %428 = vmatprep.subr.mxu0 0.0
  %429 = vmatpush1.msra.mxu0 0.0
  %430 = vmatprep.subr.mxu0 0.0
  %431 = vmatpush1.msra.mxu0 0.0
  %432 = vmatprep.subr.mxu0 0.0
  %433 = vmatpush1.msra.mxu0 0.0
  %434 = vmatprep.subr.mxu0 0.0
  %435 = vmatpush1.msra.mxu0 0.0
  %436 = vmatprep.subr.mxu0 0.0
  %437 = vmatpush1.msra.mxu0 0.0
  %438 = vmatprep.subr.mxu0 0.0
  %439 = vmatpush1.msra.mxu0 0.0
  %440 = vmatprep.subr.mxu0 0.0
  %441 = vmatpush1.msra.mxu0 0.0
  %442 = vmatprep.subr.mxu0 0.0
  %443 = vmatpush1.msra.mxu0 0.0
  %444 = vmatprep.subr.mxu0 0.0
  %445 = vmatpush1.msra.mxu0 0.0
  %446 = vmatprep.subr.mxu0 0.0
  %447 = vmatpush1.msra.mxu0 0.0
  %448 = vmatprep.mubr.f32.mxu0 0.0
  %449 = vmatmul.mubr.f32.gmra.mrb[0].mxu0 %v382
  %v450 = vpop.f32.mrb[0].mxu0
  %v451 = vadd.f32 %v378, %v450
  %v452 = vpop.f32.mrb[0].mxu0
  %v453 = vadd.f32 %v378, %v452
  %454 = vdwg.mxu0
  %455 = vmatprep.subr.mxu0 %v336
  %456 = vmatpush1.msra.mxu0 %v335
  %457 = vmatprep.subr.mxu0 %v344
  %458 = vmatpush1.msra.mxu0 %v343
  %459 = vmatprep.subr.mxu0 %v352
  %460 = vmatpush1.msra.mxu0 %v351
  %461 = vmatprep.subr.mxu0 %v360
  %462 = vmatpush1.msra.mxu0 %v359
  %463 = vmatprep.subr.mxu0 %v368
  %464 = vmatpush1.msra.mxu0 %v367
  %465 = vmatprep.subr.mxu0 0.0
  %466 = vmatpush1.msra.mxu0 0.0
  %467 = vmatprep.subr.mxu0 0.0
  %468 = vmatpush1.msra.mxu0 0.0
  %469 = vmatprep.subr.mxu0 0.0
  %470 = vmatpush1.msra.mxu0 0.0
  %471 = vmatprep.subr.mxu0 0.0
  %472 = vmatpush1.msra.mxu0 0.0
  %473 = vmatprep.subr.mxu0 0.0
  %474 = vmatpush1.msra.mxu0 0.0
  %475 = vmatprep.subr.mxu0 0.0
  %476 = vmatpush1.msra.mxu0 0.0
  %477 = vmatprep.subr.mxu0 0.0
  %478 = vmatpush1.msra.mxu0 0.0
  %479 = vmatprep.subr.mxu0 0.0
  %480 = vmatpush1.msra.mxu0 0.0
  %481 = vmatprep.subr.mxu0 0.0
  %482 = vmatpush1.msra.mxu0 0.0
  %483 = vmatprep.subr.mxu0 0.0
  %484 = vmatpush1.msra.mxu0 0.0
  %485 = vmatprep.subr.mxu0 0.0
  %486 = vmatpush1.msra.mxu0 0.0
  %487 = vmatprep.subr.mxu0 0.0
  %488 = vmatpush1.msra.mxu0 0.0
  %489 = vmatprep.subr.mxu0 0.0
  %490 = vmatpush1.msra.mxu0 0.0
  %491 = vmatprep.subr.mxu0 0.0
  %492 = vmatpush1.msra.mxu0 0.0
  %493 = vmatprep.subr.mxu0 0.0
  %494 = vmatpush1.msra.mxu0 0.0
  %495 = vmatprep.subr.mxu0 0.0
  %496 = vmatpush1.msra.mxu0 0.0
  %497 = vmatprep.subr.mxu0 0.0
  %498 = vmatpush1.msra.mxu0 0.0
  %499 = vmatprep.subr.mxu0 0.0
  %500 = vmatpush1.msra.mxu0 0.0
  %501 = vmatprep.subr.mxu0 0.0
  %502 = vmatpush1.msra.mxu0 0.0
  %503 = vmatprep.subr.mxu0 0.0
  %504 = vmatpush1.msra.mxu0 0.0
  %505 = vmatprep.subr.mxu0 0.0
  %506 = vmatpush1.msra.mxu0 0.0
  %507 = vmatprep.subr.mxu0 0.0
  %508 = vmatpush1.msra.mxu0 0.0
  %509 = vmatprep.subr.mxu0 0.0
  %510 = vmatpush1.msra.mxu0 0.0
  %511 = vmatprep.subr.mxu0 0.0
  %512 = vmatpush1.msra.mxu0 0.0
  %513 = vmatprep.subr.mxu0 0.0
  %514 = vmatpush1.msra.mxu0 0.0
  %515 = vmatprep.subr.mxu0 0.0
  %516 = vmatpush1.msra.mxu0 0.0
  %517 = vmatprep.subr.mxu0 0.0
  %518 = vmatpush1.msra.mxu0 0.0
  %519 = vmatprep.mubr.f32.mxu0 0.0
  %520 = vmatmul.mubr.f32.gmra.mrb[0].mxu0 %v382
  %v521 = vpop.f32.mrb[0].mxu0
  %v522 = vadd.f32 %v378, %v521
  %v523 = vpop.f32.mrb[0].mxu0
  %v524 = vadd.f32 %v378, %v523
  %525 = vdwg.mxu0
  %526 = vmatprep.subr.mxu0 %v338
  %527 = vmatpush1.msra.mxu0 %v337
  %528 = vmatprep.subr.mxu0 %v346
  %529 = vmatpush1.msra.mxu0 %v345
  %530 = vmatprep.subr.mxu0 %v354
  %531 = vmatpush1.msra.mxu0 %v353
  %532 = vmatprep.subr.mxu0 %v362
  %533 = vmatpush1.msra.mxu0 %v361
  %534 = vmatprep.subr.mxu0 %v370
  %535 = vmatpush1.msra.mxu0 %v369
  %536 = vmatprep.subr.mxu0 0.0
  %537 = vmatpush1.msra.mxu0 0.0
  %538 = vmatprep.subr.mxu0 0.0
  %539 = vmatpush1.msra.mxu0 0.0
  %540 = vmatprep.subr.mxu0 0.0
  %541 = vmatpush1.msra.mxu0 0.0
  %542 = vmatprep.subr.mxu0 0.0
  %543 = vmatpush1.msra.mxu0 0.0
  %544 = vmatprep.subr.mxu0 0.0
  %545 = vmatpush1.msra.mxu0 0.0
  %546 = vmatprep.subr.mxu0 0.0
  %547 = vmatpush1.msra.mxu0 0.0
  %548 = vmatprep.subr.mxu0 0.0
  %549 = vmatpush1.msra.mxu0 0.0
  %550 = vmatprep.subr.mxu0 0.0
  %551 = vmatpush1.msra.mxu0 0.0
  %552 = vmatprep.subr.mxu0 0.0
  %553 = vmatpush1.msra.mxu0 0.0
  %554 = vmatprep.subr.mxu0 0.0
  %555 = vmatpush1.msra.mxu0 0.0
  %556 = vmatprep.subr.mxu0 0.0
  %557 = vmatpush1.msra.mxu0 0.0
  %558 = vmatprep.subr.mxu0 0.0
  %559 = vmatpush1.msra.mxu0 0.0
  %560 = vmatprep.subr.mxu0 0.0
  %561 = vmatpush1.msra.mxu0 0.0
  %562 = vmatprep.subr.mxu0 0.0
  %563 = vmatpush1.msra.mxu0 0.0
  %564 = vmatprep.subr.mxu0 0.0
  %565 = vmatpush1.msra.mxu0 0.0
  %566 = vmatprep.subr.mxu0 0.0
  %567 = vmatpush1.msra.mxu0 0.0
  %568 = vmatprep.subr.mxu0 0.0
  %569 = vmatpush1.msra.mxu0 0.0
  %570 = vmatprep.subr.mxu0 0.0
  %571 = vmatpush1.msra.mxu0 0.0
  %572 = vmatprep.subr.mxu0 0.0
  %573 = vmatpush1.msra.mxu0 0.0
  %574 = vmatprep.subr.mxu0 0.0
  %575 = vmatpush1.msra.mxu0 0.0
  %576 = vmatprep.subr.mxu0 0.0
  %577 = vmatpush1.msra.mxu0 0.0
  %578 = vmatprep.subr.mxu0 0.0
  %579 = vmatpush1.msra.mxu0 0.0
  %580 = vmatprep.subr.mxu0 0.0
  %581 = vmatpush1.msra.mxu0 0.0
  %582 = vmatprep.subr.mxu0 0.0
  %583 = vmatpush1.msra.mxu0 0.0
  %584 = vmatprep.subr.mxu0 0.0
  %585 = vmatpush1.msra.mxu0 0.0
  %586 = vmatprep.subr.mxu0 0.0
  %587 = vmatpush1.msra.mxu0 0.0
  %588 = vmatprep.subr.mxu0 0.0
  %589 = vmatpush1.msra.mxu0 0.0
  %590 = vmatprep.mubr.f32.mxu0 0.0
  %591 = vmatmul.mubr.f32.gmra.mrb[0].mxu0 %v382
  %v592 = vpop.f32.mrb[0].mxu0
  %v593 = vadd.f32 %v378, %v592
  %v594 = vpop.f32.mrb[0].mxu0
  %v595 = vadd.f32 %v378, %v594
  %596 = vdwg.mxu0
  %597 = vmatprep.subr.mxu0 %v340
  %598 = vmatpush1.msra.mxu0 %v339
  %599 = vmatprep.subr.mxu0 %v348
  %600 = vmatpush1.msra.mxu0 %v347
  %601 = vmatprep.subr.mxu0 %v356
  %602 = vmatpush1.msra.mxu0 %v355
  %603 = vmatprep.subr.mxu0 %v364
  %604 = vmatpush1.msra.mxu0 %v363
  %605 = vmatprep.subr.mxu0 %v372
  %606 = vmatpush1.msra.mxu0 %v371
  %607 = vmatprep.subr.mxu0 0.0
  %608 = vmatpush1.msra.mxu0 0.0
  %609 = vmatprep.subr.mxu0 0.0
  %610 = vmatpush1.msra.mxu0 0.0
  %611 = vmatprep.subr.mxu0 0.0
  %612 = vmatpush1.msra.mxu0 0.0
  %613 = vmatprep.subr.mxu0 0.0
  %614 = vmatpush1.msra.mxu0 0.0
  %615 = vmatprep.subr.mxu0 0.0
  %616 = vmatpush1.msra.mxu0 0.0
  %617 = vmatprep.subr.mxu0 0.0
  %618 = vmatpush1.msra.mxu0 0.0
  %619 = vmatprep.subr.mxu0 0.0
  %620 = vmatpush1.msra.mxu0 0.0
  %621 = vmatprep.subr.mxu0 0.0
  %622 = vmatpush1.msra.mxu0 0.0
  %623 = vmatprep.subr.mxu0 0.0
  %624 = vmatpush1.msra.mxu0 0.0
  %625 = vmatprep.subr.mxu0 0.0
  %626 = vmatpush1.msra.mxu0 0.0
  %627 = vmatprep.subr.mxu0 0.0
  %628 = vmatpush1.msra.mxu0 0.0
  %629 = vmatprep.subr.mxu0 0.0
  %630 = vmatpush1.msra.mxu0 0.0
  %631 = vmatprep.subr.mxu0 0.0
  %632 = vmatpush1.msra.mxu0 0.0
  %633 = vmatprep.subr.mxu0 0.0
  %634 = vmatpush1.msra.mxu0 0.0
  %635 = vmatprep.subr.mxu0 0.0
  %636 = vmatpush1.msra.mxu0 0.0
  %637 = vmatprep.subr.mxu0 0.0
  %638 = vmatpush1.msra.mxu0 0.0
  %639 = vmatprep.subr.mxu0 0.0
  %640 = vmatpush1.msra.mxu0 0.0
  %641 = vmatprep.subr.mxu0 0.0
  %642 = vmatpush1.msra.mxu0 0.0
  %643 = vmatprep.subr.mxu0 0.0
  %644 = vmatpush1.msra.mxu0 0.0
  %645 = vmatprep.subr.mxu0 0.0
  %646 = vmatpush1.msra.mxu0 0.0
  %647 = vmatprep.subr.mxu0 0.0
  %648 = vmatpush1.msra.mxu0 0.0
  %649 = vmatprep.subr.mxu0 0.0
  %650 = vmatpush1.msra.mxu0 0.0
  %651 = vmatprep.subr.mxu0 0.0
  %652 = vmatpush1.msra.mxu0 0.0
  %653 = vmatprep.subr.mxu0 0.0
  %654 = vmatpush1.msra.mxu0 0.0
  %655 = vmatprep.subr.mxu0 0.0
  %656 = vmatpush1.msra.mxu0 0.0
  %657 = vmatprep.subr.mxu0 0.0
  %658 = vmatpush1.msra.mxu0 0.0
  %659 = vmatprep.subr.mxu0 0.0
  %660 = vmatpush1.msra.mxu0 0.0
  %661 = vmatprep.mubr.f32.mxu0 0.0
  %662 = vmatmul.mubr.f32.gmra.mrb[0].mxu0 %v382
  %v663 = vpop.f32.mrb[0].mxu0
  %v664 = vadd.f32 %v378, %v663
  %v665 = vpop.f32.mrb[0].mxu0
  %v666 = vadd.f32 %v378, %v665
  %667 = vdwg.mxu0
  %668 = vst [vmem:[%s3] sm:$0xff] %v451
  %669 = vst [vmem:[%s3 + $0x8] sm:$0xff] %v453
  %670 = vst [vmem:[%s3 + $0x10] sm:$0xff] %v522
  %671 = vst [vmem:[%s3 + $0x18] sm:$0xff] %v524
  %s672 = scalar_lea.vmem %s3, 32
  %673 = vst [vmem:[%s672] sm:$0xff] %v593
  %674 = vst [vmem:[%s672 + $0x8] sm:$0xff] %v595
  %675 = vst [vmem:[%s672 + $0x10] sm:$0xff] %v664
  %676 = vst [vmem:[%s672 + $0x18] sm:$0xff] %v666
  // Predicated region
  $region14: #{conv_t_forward.1} parent=0 // pred_check
    _
  $region15: #{conv_t_forward.1} parent=0 // pred_check_branch
    %678 = sbr.rel (0) target = $region17
  $region16: #{conv_t_forward.1} parent=0 // pred_region
    _
  $region17: #{conv_t_forward.1} parent=0 // pred_fallthru
    _
  // Predicated region
  $region18: #{conv_t_forward.1} parent=0 // pred_check
    _
  $region19: #{conv_t_forward.1} parent=0 // pred_check_branch
    %680 = sbr.rel (0) target = $region21
  $region20: #{conv_t_forward.1} parent=0 // pred_region
    _
  $region21: #{conv_t_forward.1} parent=0 // pred_fallthru
    _

</llo_original>
